<compile_context>
chip_gen: v6e
topology: v6e:2x2x1
jax: 0.10.0
libtpu: 0.0.40
codegen_flags: <defaults>
</compile_context>

<pallas_src>
import jax
import jax.numpy as jnp
from jax.experimental import pallas as pl
from jax.experimental.pallas import tpu as pltpu

EPS = 1e-5
VMEM_LIMIT = 32 * 1024 * 1024     # fits v5e/v6e (128 MiB) and v7x (64 MiB physical)
MAX_LANE_TILE = 2048              # could be raised to 4096-8192 on v5e/v6e only


# --------------------------------------------------------------------------- #
# Pallas kernels
# --------------------------------------------------------------------------- #
def _stats_y_kernel(p_ref, w_ref, sum_ref, ssq_ref, y_ref):
    """Pass 1 (small-2C path): y = W @ P; cache y and accumulate per-channel stats."""
    @pl.when(pl.program_id(1) == 0)          # first batch element for this hw tile
    def _():
        sum_ref[...] = jnp.zeros_like(sum_ref)
        ssq_ref[...] = jnp.zeros_like(ssq_ref)

    # [2C_pad, K_pad] @ [K_pad, T_HW] -> [2C_pad, T_HW]; bf16 operands, f32 accum.
    y = jnp.dot(w_ref[...], p_ref[...], preferred_element_type=jnp.float32)
    y_ref[...] = y                           # cached for pass 2 (no patch re-read)
    sum_ref[...] += y                        # per-lane partials; lane reduce in wrapper
    ssq_ref[...] += y * y


def _stats_kernel(p_ref, w_ref, sum_ref, ssq_ref):
    """Pass 1 (large-2C path): stats only; pass 2 recomputes W @ P."""
    @pl.when(pl.program_id(1) == 0)
    def _():
        sum_ref[...] = jnp.zeros_like(sum_ref)
        ssq_ref[...] = jnp.zeros_like(ssq_ref)

    y = jnp.dot(w_ref[...], p_ref[...], preferred_element_type=jnp.float32)
    sum_ref[...] += y
    ssq_ref[...] += y * y


def _bn_from_y_kernel(y_ref, scale_ref, shift_ref, out_ref):
    """Pass 2 (small-2C path): folded BN + ReLU + batch-sum of the cached y."""
    @pl.when(pl.program_id(1) == 0)
    def _():
        out_ref[...] = jnp.zeros_like(out_ref)
    out_ref[...] += jnp.maximum(y_ref[...] * scale_ref[...] + shift_ref[...], 0.0)


def _bn_recompute_kernel(p_ref, ws_ref, shift_ref, out_ref):
    """Pass 2 (large-2C path): recompute matmul with BN scale folded into weights."""
    @pl.when(pl.program_id(1) == 0)
    def _():
        out_ref[...] = jnp.zeros_like(out_ref)
    y = jnp.dot(ws_ref[...], p_ref[...], preferred_element_type=jnp.float32)
    out_ref[...] += jnp.maximum(y + shift_ref[...], 0.0)


# --------------------------------------------------------------------------- #
# Wrapper
# --------------------------------------------------------------------------- #
def _im2col_nkm(x, kh, kw, stride, pad):
    """x: [N, Cin, H, W] -> patches [N, Cin*kh*kw, H_out*W_out] (K channel-major)."""
    n, cin, h, w = x.shape
    h_out = (h + 2 * pad - kh) // stride + 1
    w_out = (w + 2 * pad - kw) // stride + 1
    xp = jnp.pad(x, ((0, 0), (0, 0), (pad, pad), (pad, pad)))
    taps = []
    for i in range(kh):
        for j in range(kw):
            taps.append(xp[:, :, i:i + stride * h_out:stride,
                            j:j + stride * w_out:stride])
    pat = jnp.stack(taps, axis=2)            # [N, Cin, kh*kw, H_out, W_out]
    # TODO(synk): highest-value remaining step per the perf review -- skip this HBM
    # materialization entirely: keep padded x in HBM (memory_space=pl.ANY), DMA a
    # contiguous input row strip per hw tile with pltpu.make_async_copy and build
    # the 49 taps in VMEM (stride-2 phase split + pltpu.roll) right before the dot.
    return pat.reshape(n, cin * kh * kw, h_out * w_out), h_out, w_out


def _round_up(v, m):
    return (v + m - 1) // m * m


def _pick_tile(hw, max_tile=MAX_LANE_TILE):
    """Lane tile (multiple of 128, <= max_tile) minimizing total padded columns."""
    cap = min(max_tile, _round_up(hw, 128))
    best_t, best_total = 128, None
    for t in range(128, cap + 128, 128):
        total = pl.cdiv(hw, t) * t
        if best_total is None or total < best_total or (total == best_total and t > best_t):
            best_t, best_total = t, total
    return best_t, best_total                # (t_hw, hw_pad)


def modified_conv_alt_add(x, w3, w1, gamma3, beta3, gamma1, beta1):
    """x: [N,4,H,W] f32. w3: [C,3,7,7], w1: [C,1,7,7]. Returns [2C, H/2, W/2] f32."""
    n, cin, h, w = x.shape
    assert cin == 4
    c_out = w3.shape[0]
    c2 = 2 * c_out

    # im2col over ALL 4 channels at once (merged-branch matmul).
    pat, h_out, w_out = _im2col_nkm(x, 7, 7, 2, 3)        # [N, 196, hw]
    hw = h_out * w_out
    k_real = cin * 49

    # Padding: K -> mult of 16 (bf16 sublane; block == full dim so legal),
    #          hw -> mult of the chosen lane tile, channels -> mult of 16.
    k_pad = _round_up(k_real, 16)                          # 196 -> 208 (was 256)
    c2_pad = _round_up(c2, 16)
    t_hw, hw_pad = _pick_tile(hw)
    n_hw_tiles = hw_pad // t_hw

    patches = jnp.zeros((n, k_pad, hw_pad), jnp.bfloat16)
    patches = patches.at[:, :k_real, :hw].set(pat.astype(jnp.bfloat16))

    # Block-structured merged weight [2C_pad, K_pad]:
    #   rows 0:C  <- w3 (input channels 0..2, K cols   0:147)
    #   rows C:2C <- w1 (input channel  3,    K cols 147:196), zeros elsewhere.
    wm_f32 = jnp.zeros((c2_pad, k_pad), jnp.float32)
    wm_f32 = wm_f32.at[:c_out, :3 * 49].set(w3.reshape(c_out, 3 * 49))
    wm_f32 = wm_f32.at[c_out:c2, 3 * 49:4 * 49].set(w1.reshape(c_out, 49))
    wm = wm_f32.astype(jnp.bfloat16)

    grid = (n_hw_tiles, n)                   # hw tiles outer (parallel), batch inner
    p_spec = pl.BlockSpec((None, k_pad, t_hw), lambda t, b: (b, 0, t))
    w_spec = pl.BlockSpec((c2_pad, k_pad), lambda t, b: (0, 0))
    stat_spec = pl.BlockSpec((c2_pad, t_hw), lambda t, b: (0, t))   # per-tile slab
    y_spec = pl.BlockSpec((None, c2_pad, t_hw), lambda t, b: (b, 0, t))
    vec_spec = pl.BlockSpec((c2_pad, 1), lambda t, b: (0, 0))
    out_spec = pl.BlockSpec((c2_pad, t_hw), lambda t, b: (0, t))

    cparams = pltpu.CompilerParams(
        dimension_semantics=("parallel", "arbitrary"),
        vmem_limit_bytes=VMEM_LIMIT)

    stat_shape = jax.ShapeDtypeStruct((c2_pad, hw_pad), jnp.float32)
    # Cache y (f32 write + read) only when it beats re-reading the bf16 patches.
    use_y_cache = 8 * c2_pad <= 2 * k_pad

    # ---- Pass 1: per-channel batch statistics (+ optional y cache). ----
    if use_y_cache:
        sum_out, ssq_out, y_cache = pl.pallas_call(
            _stats_y_kernel,
            out_shape=(stat_shape, stat_shape,
                       jax.ShapeDtypeStruct((n, c2_pad, hw_pad), jnp.float32)),
            grid_spec=pltpu.PrefetchScalarGridSpec(
                num_scalar_prefetch=0, grid=grid,
                in_specs=[p_spec, w_spec],
                out_specs=(stat_spec, stat_spec, y_spec)),
            compiler_params=cparams,
        )(patches, wm)
    else:
        sum_out, ssq_out = pl.pallas_call(
            _stats_kernel,
            out_shape=(stat_shape, stat_shape),
            grid_spec=pltpu.PrefetchScalarGridSpec(
                num_scalar_prefetch=0, grid=grid,
                in_specs=[p_spec, w_spec],
                out_specs=(stat_spec, stat_spec)),
            compiler_params=cparams,
        )(patches, wm)
        y_cache = None

    # Tiny lane reduction + fold BN affine into per-channel scale/shift (plain JAX).
    m_real = n * hw                          # padded columns contribute exact zeros
    mean = sum_out[:c2].sum(axis=-1) / m_real
    var = ssq_out[:c2].sum(axis=-1) / m_real - mean * mean   # biased (training BN)
    var = jnp.maximum(var, 0.0)              # guard E[y^2]-mean^2 cancellation
    gamma = jnp.concatenate([gamma3, gamma1])
    beta = jnp.concatenate([beta3, beta1])
    scale = gamma * jax.lax.rsqrt(var + EPS)
    shift = beta - mean * scale
    scale_p = jnp.zeros((c2_pad, 1), jnp.float32).at[:c2, 0].set(scale)
    shift_p = jnp.zeros((c2_pad, 1), jnp.float32).at[:c2, 0].set(shift)

    # ---- Pass 2: normalize + ReLU + batch-sum; channel-major [2C, hw] output. ----
    if use_y_cache:
        out_full = pl.pallas_call(
            _bn_from_y_kernel,
            out_shape=jax.ShapeDtypeStruct((c2_pad, hw_pad), jnp.float32),
            grid_spec=pltpu.PrefetchScalarGridSpec(
                num_scalar_prefetch=0, grid=grid,
                in_specs=[y_spec, vec_spec, vec_spec],
                out_specs=out_spec),
            compiler_params=cparams,
        )(y_cache, scale_p, shift_p)
    else:
        ws = (wm_f32 * scale_p).astype(jnp.bfloat16)   # fold BN scale into weights
        out_full = pl.pallas_call(
            _bn_recompute_kernel,
            out_shape=jax.ShapeDtypeStruct((c2_pad, hw_pad), jnp.float32),
            grid_spec=pltpu.PrefetchScalarGridSpec(
                num_scalar_prefetch=0, grid=grid,
                in_specs=[p_spec, w_spec, vec_spec],
                out_specs=out_spec),
            compiler_params=cparams,
        )(patches, ws, shift_p)

    return out_full[:c2, :hw].reshape(c2, h_out, w_out)


# --------------------------------------------------------------------------- #
# Pure-JAX reference (exact PyTorch forward) + smoke test
# --------------------------------------------------------------------------- #
def _reference(x, w3, w1, g3, b3, g1, b1):
    x3, x1 = x[:, :3], x[:, 3:4]
    dn = ('NCHW', 'OIHW', 'NCHW')
    y3 = jax.lax.conv_general_dilated(x3, w3, (2, 2), ((3, 3), (3, 3)),
                                      dimension_numbers=dn)
    y1 = jax.lax.conv_general_dilated(x1, w1, (2, 2), ((3, 3), (3, 3)),
                                      dimension_numbers=dn)

    def bn_relu(y, g, b):
        mean = y.mean(axis=(0, 2, 3), keepdims=True)
        var = jnp.square(y - mean).mean(axis=(0, 2, 3), keepdims=True)
        yh = (y - mean) / jnp.sqrt(var + EPS)
        return jnp.maximum(yh * g.reshape(1, -1, 1, 1) + b.reshape(1, -1, 1, 1), 0.0)

    cat = jnp.concatenate([bn_relu(y3, g3, b3), bn_relu(y1, g1, b1)], axis=1)
    return cat.sum(axis=0)       # sum(tensor) iterates over dim 0 (batch)


if __name__ == "__main__":
    N, C_IN, H, W = 2, 4, 16, 16
    C_OUT = 8

    key = jax.random.PRNGKey(0)
    kx, kw3, kw1, kg3, kb3, kg1, kb1 = jax.random.split(key, 7)
    x = jax.random.normal(kx, (N, C_IN, H, W), jnp.float32)
    w3 = jax.random.normal(kw3, (C_OUT, 3, 7, 7), jnp.float32) * 0.1
    w1 = jax.random.normal(kw1, (C_OUT, 1, 7, 7), jnp.float32) * 0.1
    gamma3 = 1.0 + 0.1 * jax.random.normal(kg3, (C_OUT,), jnp.float32)
    beta3 = 0.1 * jax.random.normal(kb3, (C_OUT,), jnp.float32)
    gamma1 = 1.0 + 0.1 * jax.random.normal(kg1, (C_OUT,), jnp.float32)
    beta1 = 0.1 * jax.random.normal(kb1, (C_OUT,), jnp.float32)

    fn = jax.jit(modified_conv_alt_add)
    out = jax.block_until_ready(fn(x, w3, w1, gamma3, beta3, gamma1, beta1))

    ref = _reference(x, w3, w1, gamma3, beta3, gamma1, beta1)
    assert out.shape == (2 * C_OUT, H // 2, W // 2), out.shape
    # bf16 MXU operands (f32 accumulation) -> slightly looser tolerance than pure f32.
    if not jnp.allclose(out, ref, atol=5e-2, rtol=5e-2):
        err = float(jnp.max(jnp.abs(out - ref)))
        raise AssertionError(f"Pallas kernel mismatch vs JAX reference (max err {err})")
    print("KERNEL_OK")
</pallas_src>

<mosaic_0001>
module attributes {stable_mosaic.version = 11 : i64} {
  func.func @_stats_y_kernel(%arg0: i32, %arg1: i32, %arg2: memref<1x208x128xbf16, #tpu.memory_space<vmem>>, %arg3: memref<16x208xbf16, #tpu.memory_space<vmem>>, %arg4: memref<16x128xf32, #tpu.memory_space<vmem>>, %arg5: memref<16x128xf32, #tpu.memory_space<vmem>>, %arg6: memref<1x16x128xf32, #tpu.memory_space<vmem>>) attributes {dimension_semantics = [#tpu.dimension_semantics<parallel>, #tpu.dimension_semantics<arbitrary>], iteration_bounds = array<i64: 1, 2>, scalar_prefetch = 0 : i64, scratch_operands = 0 : i64, tpu.core_type = #tpu.core_type<tc>, window_params = [{transform_indices = @transform_0, window_bounds = array<i64: 1, 208, 128>}, {pipeline_mode = #tpu.pipeline_mode<synchronous>, transform_indices = @transform_1, window_bounds = array<i64: 16, 208>}, {transform_indices = @transform_2, window_bounds = array<i64: 16, 128>}, {transform_indices = @transform_3, window_bounds = array<i64: 16, 128>}, {transform_indices = @transform_4, window_bounds = array<i64: 1, 16, 128>}]} {
    %c0_i32 = arith.constant 0 : i32
    %0 = arith.cmpi eq, %arg1, %c0_i32 : i32
    %1 = arith.extui %0 : i1 to i32
    %c0_i32_0 = arith.constant 0 : i32
    %2 = arith.cmpi ne, %1, %c0_i32_0 : i32
    scf.if %2 {
      %cst_16 = arith.constant 0.000000e+00 : f32
      %17 = vector.broadcast %cst_16 : f32 to vector<16x128xf32>
      %c0_17 = arith.constant 0 : index
      %c0_18 = arith.constant 0 : index
      %18 = vector.load %arg4[%c0_17, %c0_18] : memref<16x128xf32, #tpu.memory_space<vmem>>, vector<16x128xf32>
      tpu.vector_store %arg4[%c0_17, %c0_18], %17 {strides = array<i32>} : memref<16x128xf32, #tpu.memory_space<vmem>>, vector<16x128xf32>,
      %cst_19 = arith.constant 0.000000e+00 : f32
      %19 = vector.broadcast %cst_19 : f32 to vector<16x128xf32>
      %c0_20 = arith.constant 0 : index
      %c0_21 = arith.constant 0 : index
      %20 = vector.load %arg5[%c0_20, %c0_21] : memref<16x128xf32, #tpu.memory_space<vmem>>, vector<16x128xf32>
      tpu.vector_store %arg5[%c0_20, %c0_21], %19 {strides = array<i32>} : memref<16x128xf32, #tpu.memory_space<vmem>>, vector<16x128xf32>,
    } else {
    }
    %c0 = arith.constant 0 : index
    %c0_1 = arith.constant 0 : index
    %3 = vector.load %arg3[%c0, %c0_1] : memref<16x208xbf16, #tpu.memory_space<vmem>>, vector<16x208xbf16>
    %c0_2 = arith.constant 0 : index
    %c0_3 = arith.constant 0 : index
    %c0_4 = arith.constant 0 : index
    %4 = vector.load %arg2[%c0_2, %c0_3, %c0_4] : memref<1x208x128xbf16, #tpu.memory_space<vmem>>, vector<1x208x128xbf16>
    %5 = vector.shape_cast %4 : vector<1x208x128xbf16> to vector<208x128xbf16>
    %cst = arith.constant dense<0.000000e+00> : vector<16x128xf32>
    %6 = tpu.matmul %3, %5, %cst {dimension_numbers = #tpu.dot_dimension_numbers<[1], [0], [0], [1], [0, 0, 1, 1], [], []>} : vector<16x208xbf16>, vector<208x128xbf16>, vector<16x128xf32> -> vector<16x128xf32>
    %c0_5 = arith.constant 0 : index
    %c0_6 = arith.constant 0 : index
    %c0_7 = arith.constant 0 : index
    %7 = vector.load %arg6[%c0_5, %c0_6, %c0_7] : memref<1x16x128xf32, #tpu.memory_space<vmem>>, vector<1x16x128xf32>
    %8 = vector.shape_cast %7 : vector<1x16x128xf32> to vector<16x128xf32>
    %9 = vector.shape_cast %6 : vector<16x128xf32> to vector<1x16x128xf32>
    tpu.vector_store %arg6[%c0_5, %c0_6, %c0_7], %9 {strides = array<i32>} : memref<1x16x128xf32, #tpu.memory_space<vmem>>, vector<1x16x128xf32>,
    %c0_8 = arith.constant 0 : index
    %c0_9 = arith.constant 0 : index
    %10 = vector.load %arg4[%c0_8, %c0_9] : memref<16x128xf32, #tpu.memory_space<vmem>>, vector<16x128xf32>
    %11 = arith.addf %10, %6 : vector<16x128xf32>
    %c0_10 = arith.constant 0 : index
    %c0_11 = arith.constant 0 : index
    %12 = vector.load %arg4[%c0_10, %c0_11] : memref<16x128xf32, #tpu.memory_space<vmem>>, vector<16x128xf32>
    tpu.vector_store %arg4[%c0_10, %c0_11], %11 {strides = array<i32>} : memref<16x128xf32, #tpu.memory_space<vmem>>, vector<16x128xf32>,
    %c0_12 = arith.constant 0 : index
    %c0_13 = arith.constant 0 : index
    %13 = vector.load %arg5[%c0_12, %c0_13] : memref<16x128xf32, #tpu.memory_space<vmem>>, vector<16x128xf32>
    %14 = arith.mulf %6, %6 : vector<16x128xf32>
    %15 = arith.addf %13, %14 : vector<16x128xf32>
    %c0_14 = arith.constant 0 : index
    %c0_15 = arith.constant 0 : index
    %16 = vector.load %arg5[%c0_14, %c0_15] : memref<16x128xf32, #tpu.memory_space<vmem>>, vector<16x128xf32>
    tpu.vector_store %arg5[%c0_14, %c0_15], %15 {strides = array<i32>} : memref<16x128xf32, #tpu.memory_space<vmem>>, vector<16x128xf32>,
    return
  }
  func.func @transform_0(%arg0: i32, %arg1: i32) -> (i32, i32, i32) {
    %c0_i32 = arith.constant 0 : i32
    %c0_i32_0 = arith.constant 0 : i32
    return %arg1, %c0_i32, %arg0 : i32, i32, i32
  }
  func.func @transform_1(%arg0: i32, %arg1: i32) -> (i32, i32) {
    %c0_i32 = arith.constant 0 : i32
    %c0_i32_0 = arith.constant 0 : i32
    %c0_i32_1 = arith.constant 0 : i32
    return %c0_i32, %c0_i32_0 : i32, i32
  }
  func.func @transform_2(%arg0: i32, %arg1: i32) -> (i32, i32) {
    %c0_i32 = arith.constant 0 : i32
    %c0_i32_0 = arith.constant 0 : i32
    return %c0_i32, %arg0 : i32, i32
  }
  func.func @transform_3(%arg0: i32, %arg1: i32) -> (i32, i32) {
    %c0_i32 = arith.constant 0 : i32
    %c0_i32_0 = arith.constant 0 : i32
    return %c0_i32, %arg0 : i32, i32
  }
  func.func @transform_4(%arg0: i32, %arg1: i32) -> (i32, i32, i32) {
    %c0_i32 = arith.constant 0 : i32
    %c0_i32_0 = arith.constant 0 : i32
    return %arg1, %c0_i32, %arg0 : i32, i32, i32
  }
}

module attributes {stable_mosaic.version = 11 : i64} {
  func.func @_bn_from_y_kernel(%arg0: i32, %arg1: i32, %arg2: memref<1x16x128xf32, #tpu.memory_space<vmem>>, %arg3: memref<16x1xf32, #tpu.memory_space<vmem>>, %arg4: memref<16x1xf32, #tpu.memory_space<vmem>>, %arg5: memref<16x128xf32, #tpu.memory_space<vmem>>) attributes {dimension_semantics = [#tpu.dimension_semantics<parallel>, #tpu.dimension_semantics<arbitrary>], iteration_bounds = array<i64: 1, 2>, scalar_prefetch = 0 : i64, scratch_operands = 0 : i64, tpu.core_type = #tpu.core_type<tc>, window_params = [{transform_indices = @transform_0, window_bounds = array<i64: 1, 16, 128>}, {pipeline_mode = #tpu.pipeline_mode<synchronous>, transform_indices = @transform_1, window_bounds = array<i64: 16, 1>}, {pipeline_mode = #tpu.pipeline_mode<synchronous>, transform_indices = @transform_2, window_bounds = array<i64: 16, 1>}, {transform_indices = @transform_3, window_bounds = array<i64: 16, 128>}]} {
    %c0_i32 = arith.constant 0 : i32
    %0 = arith.cmpi eq, %arg1, %c0_i32 : i32
    %1 = arith.extui %0 : i1 to i32
    %c0_i32_0 = arith.constant 0 : i32
    %2 = arith.cmpi ne, %1, %c0_i32_0 : i32
    scf.if %2 {
      %cst_11 = arith.constant 0.000000e+00 : f32
      %16 = vector.broadcast %cst_11 : f32 to vector<16x128xf32>
      %c0_12 = arith.constant 0 : index
      %c0_13 = arith.constant 0 : index
      %17 = vector.load %arg5[%c0_12, %c0_13] : memref<16x128xf32, #tpu.memory_space<vmem>>, vector<16x128xf32>
      tpu.vector_store %arg5[%c0_12, %c0_13], %16 {strides = array<i32>} : memref<16x128xf32, #tpu.memory_space<vmem>>, vector<16x128xf32>,
    } else {
    }
    %c0 = arith.constant 0 : index
    %c0_1 = arith.constant 0 : index
    %3 = vector.load %arg5[%c0, %c0_1] : memref<16x128xf32, #tpu.memory_space<vmem>>, vector<16x128xf32>
    %c0_2 = arith.constant 0 : index
    %c0_3 = arith.constant 0 : index
    %c0_4 = arith.constant 0 : index
    %4 = vector.load %arg2[%c0_2, %c0_3, %c0_4] : memref<1x16x128xf32, #tpu.memory_space<vmem>>, vector<1x16x128xf32>
    %5 = vector.shape_cast %4 : vector<1x16x128xf32> to vector<16x128xf32>
    %c0_5 = arith.constant 0 : index
    %c0_6 = arith.constant 0 : index
    %6 = vector.load %arg3[%c0_5, %c0_6] : memref<16x1xf32, #tpu.memory_space<vmem>>, vector<16x1xf32>
    %7 = vector.broadcast %6 : vector<16x1xf32> to vector<16x128xf32>
    %8 = arith.mulf %5, %7 : vector<16x128xf32>
    %c0_7 = arith.constant 0 : index
    %c0_8 = arith.constant 0 : index
    %9 = vector.load %arg4[%c0_7, %c0_8] : memref<16x1xf32, #tpu.memory_space<vmem>>, vector<16x1xf32>
    %10 = vector.broadcast %9 : vector<16x1xf32> to vector<16x128xf32>
    %11 = arith.addf %8, %10 : vector<16x128xf32>
    %cst = arith.constant 0.000000e+00 : f32
    %12 = vector.broadcast %cst : f32 to vector<16x128xf32>
    %13 = arith.maximumf %11, %12 : vector<16x128xf32>
    %14 = arith.addf %3, %13 : vector<16x128xf32>
    %c0_9 = arith.constant 0 : index
    %c0_10 = arith.constant 0 : index
    %15 = vector.load %arg5[%c0_9, %c0_10] : memref<16x128xf32, #tpu.memory_space<vmem>>, vector<16x128xf32>
    tpu.vector_store %arg5[%c0_9, %c0_10], %14 {strides = array<i32>} : memref<16x128xf32, #tpu.memory_space<vmem>>, vector<16x128xf32>,
    return
  }
  func.func @transform_0(%arg0: i32, %arg1: i32) -> (i32, i32, i32) {
    %c0_i32 = arith.constant 0 : i32
    %c0_i32_0 = arith.constant 0 : i32
    return %arg1, %c0_i32, %arg0 : i32, i32, i32
  }
  func.func @transform_1(%arg0: i32, %arg1: i32) -> (i32, i32) {
    %c0_i32 = arith.constant 0 : i32
    %c0_i32_0 = arith.constant 0 : i32
    %c0_i32_1 = arith.constant 0 : i32
    return %c0_i32, %c0_i32_0 : i32, i32
  }
  func.func @transform_2(%arg0: i32, %arg1: i32) -> (i32, i32) {
    %c0_i32 = arith.constant 0 : i32
    %c0_i32_0 = arith.constant 0 : i32
    %c0_i32_1 = arith.constant 0 : i32
    return %c0_i32, %c0_i32_0 : i32, i32
  }
  func.func @transform_3(%arg0: i32, %arg1: i32) -> (i32, i32) {
    %c0_i32 = arith.constant 0 : i32
    %c0_i32_0 = arith.constant 0 : i32
    return %c0_i32, %arg0 : i32, i32
  }
}

</mosaic_0001>

<llo_original>
// kernel: modified_conv_alt_add.2
$region0: #{modified_conv_alt_add.2}
  #allocation0 [shape = 'u32[]', space=smem, size = 0x4, offset = 0x4, fixed_abs, tag = 'smem constant byte address 0x4 - core index']
  #allocation1 [shape = 'u32[144,128]{1,0:T(1,128)}', space=vmem, size = 0x12000, scoped, tag = 'internal scratch']
  %s0 = inlined_call_operand.vmem [shape: bf16[2,208,128], index: 0, kind: input, shape index: {}]
  %s1 = inlined_call_operand.vmem [shape: bf16[16,208], index: 1, kind: input, shape index: {}]
  %s2 = inlined_call_operand.vmem [shape: f32[16,128], index: 2, kind: output, shape index: {0}]
  %s3 = inlined_call_operand.vmem [shape: f32[16,128], index: 3, kind: output, shape index: {1}]
  %s4 = inlined_call_operand.vmem [shape: f32[2,16,128], index: 4, kind: output, shape index: {2}]
  %5 = xla_tuple %s2, %s3, %s4
  %s6 = sld [smem:[#allocation0]]
  $region61: #{modified_conv_alt_add.2} parent=0
    _
  %s8 = ssub.s32 1, %s6
  %s9 = scalar_select 0, %s8, %s6
  loop: start=0, step=1, limit=4
  $region2: #{modified_conv_alt_add.2} parent=0 // loop_pre_header
    _
  $region3: #{modified_conv_alt_add.2} parent=0 // loop_header
    %s11 = sphi 0, %s15
    %p12 = scmp.ge.s32.totalorder %s11, 4
    %s18 = sphi 0, %s30
    %s19 = sphi 0, %s26
    %s20 = sphi 0, %s18
    %s21 = sphi 0, %s19
    %s22 = sphi 0, %s20
    %s23 = sphi 0, %s21
    %s35 = sphi 0, %s37
    %s38 = sphi 0, %s35
    %s39 = sphi 0, %s38
    %s55 = sphi 0, %s39
    %s59 = sphi 0, %s59
    %s61 = sphi 0, %s59
    %s62 = sphi 0, %s61
    %s76 = sphi 0, %s62
    %s82 = sphi 0, %s84
    %s85 = sphi 0, %s82
    %s86 = sphi 0, %s85
    %s102 = sphi 0, %s86
    %s108 = sphi 0, %s110
    %s111 = sphi 0, %s108
    %s112 = sphi 0, %s111
    %s128 = sphi 0, %s112
    %s136 = sphi 0, %s138
    %s139 = sphi 0, %s136
    %s140 = sphi 0, %s139
    %s156 = sphi 0, %s140
  $region4: #{modified_conv_alt_add.2} parent=0 // loop_header_branch
    %14 = sbr.rel (%p12) target = $region8
  $region5: #{modified_conv_alt_add.2} parent=0 // loop_body
    %s16 = ssub.s32 %s11, 1
    %s17 = ssub.s32 %s11, 2
    %s24 = sadd.s32 1, %s19
    %p25 = scmp.ge.s32.totalorder %s24, 2
    %s26 = scalar_select %p25, 0, %s24
    %s27 = sadd.s32 1, %s18
    %s28 = scalar_select %p25, %s27, %s18
    %p29 = scmp.ge.s32.totalorder %s28, 1
    %s30 = scalar_select %p29, 0, %s28
    %s31 = ssub.s32 %s19, %s26
    %s32 = ssub.s32 %s18, %s30
    %s33 = sor.u32 %s31, %s32
    %p34 = scmp.eq.s32.totalorder %s33, 0
    %s36 = sadd.s32 %s35, 1
    %s37 = scalar_select %p34, %s35, %s36
    %p40 = pneg %p34
    %p41 = scmp.eq.s32.totalorder %s11, 1
    %p42 = por %p40, %p41
    %p43 = scmp.ne.s32.totalorder %s35, %s38
    %p44 = scmp.eq.s32.totalorder %s11, 0
    %p45 = por %p43, %p44
    %p46 = scmp.ne.s32.totalorder %s35, %s38
    %p47 = scmp.eq.s32.totalorder %s16, 1
    %p48 = por %p46, %p47
    %p49 = scmp.ne.s32.totalorder %s38, %s39
    %p50 = scmp.eq.s32.totalorder %s16, 0
    %p51 = por %p49, %p50
    %p52 = scmp.ne.s32.totalorder %s38, %s39
    %p53 = scmp.eq.s32.totalorder %s17, 1
    %p54 = por %p52, %p53
    %p56 = scmp.ne.s32.totalorder %s39, %s55
    %p57 = scmp.eq.s32.totalorder %s17, 0
    %p58 = por %p56, %p57
    %s60 = sadd.s32 %s59, 1
    %p63 = scmp.eq.s32.totalorder %s11, 1
    %p64 = scmp.ne.s32.totalorder %s59, %s61
    %p65 = scmp.eq.s32.totalorder %s11, 0
    %p66 = por %p64, %p65
    %p67 = scmp.ne.s32.totalorder %s59, %s61
    %p68 = scmp.eq.s32.totalorder %s16, 1
    %p69 = por %p67, %p68
    %p70 = scmp.ne.s32.totalorder %s61, %s62
    %p71 = scmp.eq.s32.totalorder %s16, 0
    %p72 = por %p70, %p71
    %p73 = scmp.ne.s32.totalorder %s61, %s62
    %p74 = scmp.eq.s32.totalorder %s17, 1
    %p75 = por %p73, %p74
    %p77 = scmp.ne.s32.totalorder %s62, %s76
    %p78 = scmp.eq.s32.totalorder %s17, 0
    %p79 = por %p77, %p78
    %s80 = ssub.s32 %s18, %s30
    %p81 = scmp.eq.s32.totalorder %s80, 0
    %s83 = sadd.s32 %s82, 1
    %s84 = scalar_select %p81, %s82, %s83
    %p87 = pneg %p81
    %p88 = scmp.eq.s32.totalorder %s11, 1
    %p89 = por %p87, %p88
    %p90 = scmp.ne.s32.totalorder %s82, %s85
    %p91 = scmp.eq.s32.totalorder %s11, 0
    %p92 = por %p90, %p91
    %p93 = scmp.ne.s32.totalorder %s82, %s85
    %p94 = scmp.eq.s32.totalorder %s16, 1
    %p95 = por %p93, %p94
    %p96 = scmp.ne.s32.totalorder %s85, %s86
    %p97 = scmp.eq.s32.totalorder %s16, 0
    %p98 = por %p96, %p97
    %p99 = scmp.ne.s32.totalorder %s85, %s86
    %p100 = scmp.eq.s32.totalorder %s17, 1
    %p101 = por %p99, %p100
    %p103 = scmp.ne.s32.totalorder %s86, %s102
    %p104 = scmp.eq.s32.totalorder %s17, 0
    %p105 = por %p103, %p104
    %s106 = ssub.s32 %s18, %s30
    %p107 = scmp.eq.s32.totalorder %s106, 0
    %s109 = sadd.s32 %s108, 1
    %s110 = scalar_select %p107, %s108, %s109
    %p113 = pneg %p107
    %p114 = scmp.eq.s32.totalorder %s11, 1
    %p115 = por %p113, %p114
    %p116 = scmp.ne.s32.totalorder %s108, %s111
    %p117 = scmp.eq.s32.totalorder %s11, 0
    %p118 = por %p116, %p117
    %p119 = scmp.ne.s32.totalorder %s108, %s111
    %p120 = scmp.eq.s32.totalorder %s16, 1
    %p121 = por %p119, %p120
    %p122 = scmp.ne.s32.totalorder %s111, %s112
    %p123 = scmp.eq.s32.totalorder %s16, 0
    %p124 = por %p122, %p123
    %p125 = scmp.ne.s32.totalorder %s111, %s112
    %p126 = scmp.eq.s32.totalorder %s17, 1
    %p127 = por %p125, %p126
    %p129 = scmp.ne.s32.totalorder %s112, %s128
    %p130 = scmp.eq.s32.totalorder %s17, 0
    %p131 = por %p129, %p130
    %s132 = ssub.s32 %s19, %s26
    %s133 = ssub.s32 %s18, %s30
    %s134 = sor.u32 %s132, %s133
    %p135 = scmp.eq.s32.totalorder %s134, 0
    %s137 = sadd.s32 %s136, 1
    %s138 = scalar_select %p135, %s136, %s137
    %p141 = pneg %p135
    %p142 = scmp.eq.s32.totalorder %s11, 1
    %p143 = por %p141, %p142
    %p144 = scmp.ne.s32.totalorder %s136, %s139
    %p145 = scmp.eq.s32.totalorder %s11, 0
    %p146 = por %p144, %p145
    %p147 = scmp.ne.s32.totalorder %s136, %s139
    %p148 = scmp.eq.s32.totalorder %s16, 1
    %p149 = por %p147, %p148
    %p150 = scmp.ne.s32.totalorder %s139, %s140
    %p151 = scmp.eq.s32.totalorder %s16, 0
    %p152 = por %p150, %p151
    %p153 = scmp.ne.s32.totalorder %s139, %s140
    %p154 = scmp.eq.s32.totalorder %s17, 1
    %p155 = por %p153, %p154
    %p157 = scmp.ne.s32.totalorder %s140, %s156
    %p158 = scmp.eq.s32.totalorder %s17, 0
    %p159 = por %p157, %p158
    %p160 = scmp.le.s32.totalorder 1, %s11
    %p161 = scmp.lt.s32.totalorder %s11, 3
    %p162 = pnand %p160, %p161
    %p163 = pneg %p162
    // Predicated region
    $region9: #{modified_conv_alt_add.2} parent=5 // pred_check
      _
    $region10: #{modified_conv_alt_add.2} parent=5 // pred_check_branch
      %165 = sbr.rel (%p162) target = $region12
    $region11: #{modified_conv_alt_add.2} parent=5 // pred_region
      %s166 = ssub.s32 %s11, 1
      // Predicated region
      $region13: #{modified_conv_alt_add.2} parent=11 // pred_check
        %p167 = pneg %p72
      $region14: #{modified_conv_alt_add.2} parent=11 // pred_check_branch
        %169 = sbr.rel (%p167) target = $region16
      $region15: #{modified_conv_alt_add.2} parent=11 // pred_region
        _
      $region16: #{modified_conv_alt_add.2} parent=11 // pred_fallthru
        _
    $region12: #{modified_conv_alt_add.2} parent=5 // pred_fallthru
      _
    %p170 = scmp.lt.s32.totalorder %s11, 2
    // Predicated region
    $region17: #{modified_conv_alt_add.2} parent=5 // pred_check
      %p171 = pneg %p170
    $region18: #{modified_conv_alt_add.2} parent=5 // pred_check_branch
      %173 = sbr.rel (%p171) target = $region20
    $region19: #{modified_conv_alt_add.2} parent=5 // pred_region
      // Predicated region
      $region21: #{modified_conv_alt_add.2} parent=19 // pred_check
        %p174 = pneg %p45
      $region22: #{modified_conv_alt_add.2} parent=19 // pred_check_branch
        %176 = sbr.rel (%p174) target = $region24
      $region23: #{modified_conv_alt_add.2} parent=19 // pred_region
        %p177 = scmp.lt.s32.totalorder %s19, 1
        %s178 = scalar_select %p177, %s19, 1
        %p179 = scmp.lt.s32.totalorder %s18, 0
        %s180 = scalar_select %p179, %s18, 0
        %s181 = smul.addr %s178, 26
        %s182 = sadd.s32 %s180, %s181
        %s183 = smul.addr %s182, 4
        %s184 = scalar_lea.vmem %s0, %s183
      $region24: #{modified_conv_alt_add.2} parent=19 // pred_fallthru
        _
    $region20: #{modified_conv_alt_add.2} parent=5 // pred_fallthru
      _
    %p185 = scmp.le.s32.totalorder 1, %s11
    %p186 = scmp.lt.s32.totalorder %s11, 3
    %p187 = pnand %p185, %p186
    %p188 = pneg %p187
    // Predicated region
    $region25: #{modified_conv_alt_add.2} parent=5 // pred_check
      _
    $region26: #{modified_conv_alt_add.2} parent=5 // pred_check_branch
      %190 = sbr.rel (%p187) target = $region28
    $region27: #{modified_conv_alt_add.2} parent=5 // pred_region
      %s191 = ssub.s32 %s11, 1
      %p192 = scmp.lt.s32.totalorder %s21, 1
      %s193 = scalar_select %p192, %s21, 1
      %p194 = scmp.lt.s32.totalorder %s20, 0
      %s195 = scalar_select %p194, %s20, 0
      %s196 = smul.addr %s193, 26
      %s197 = sadd.s32 %s195, %s196
      %s198 = smul.addr %s197, 4
      %s199 = scalar_lea.vmem %s0, %s198
      %p200 = pneg %p51
      %p201 = pneg %p48
      %p202 = pneg %p72
      %p203 = pneg %p69
      %p204 = pneg %p98
      %p205 = pneg %p95
      %p206 = scmp.lt.s32.totalorder %s20, 0
      %s207 = scalar_select %p206, %s20, 0
      %s208 = smul.addr %s207, 8
      %s209 = scalar_lea.vmem %s2, %s208
      %p210 = pneg %p124
      %p211 = pneg %p121
      %p212 = scmp.lt.s32.totalorder %s20, 0
      %s213 = scalar_select %p212, %s20, 0
      %s214 = smul.addr %s213, 8
      %s215 = scalar_lea.vmem %s3, %s214
      %p216 = pneg %p152
      %p217 = pneg %p149
      %p218 = scmp.lt.s32.totalorder %s21, 1
      %s219 = scalar_select %p218, %s21, 1
      %p220 = scmp.lt.s32.totalorder %s20, 0
      %s221 = scalar_select %p220, %s20, 0
      %s222 = smul.addr %s219, 2
      %s223 = sadd.s32 %s221, %s222
      %s224 = smul.addr %s223, 8
      %s225 = scalar_lea.vmem %s4, %s224
      %p226 = scmp.lt.s32.totalorder %s21, 1
      %s227 = scalar_select %p226, %s21, 1
      %p228 = scmp.lt.s32.totalorder %s20, 0
      %s229 = scalar_select %p228, %s20, 0
      %s230 = smul.addr %s227, 26
      %s231 = sadd.s32 %s229, %s230
      %s232 = smul.addr %s231, 4
      %s233 = scalar_lea.vmem %s0, %s232
      %p234 = scmp.lt.s32.totalorder %s20, 0
      %s235 = scalar_select %p234, %s20, 0
      %s236 = smul.addr %s235, 8
      %s237 = scalar_lea.vmem %s2, %s236
      %p238 = scmp.lt.s32.totalorder %s20, 0
      %s239 = scalar_select %p238, %s20, 0
      %s240 = smul.addr %s239, 8
      %s241 = scalar_lea.vmem %s3, %s240
      %p242 = scmp.lt.s32.totalorder %s21, 1
      %s243 = scalar_select %p242, %s21, 1
      %p244 = scmp.lt.s32.totalorder %s20, 0
      %s245 = scalar_select %p244, %s20, 0
      %s246 = smul.addr %s243, 2
      %s247 = sadd.s32 %s245, %s246
      %s248 = smul.addr %s247, 8
      %s249 = scalar_lea.vmem %s4, %s248
      %p251 = scmp.eq.s32.totalorder %s21, 0
      // Predicated region
      $region29: #{modified_conv_alt_add.2} parent=27 // pred_check
        %p252 = pneg %p251
      $region30: #{modified_conv_alt_add.2} parent=27 // pred_check_branch
        %254 = sbr.rel (%p252) target = $region32
      $region31: #{modified_conv_alt_add.2} parent=27 // pred_region
        %255 = vst [vmem:[%s237] sm:$0xff] 0.0
        %256 = vst [vmem:[%s237 + $0x8] sm:$0xff] 0.0
        %257 = vst [vmem:[%s241] sm:$0xff] 0.0
        %258 = vst [vmem:[%s241 + $0x8] sm:$0xff] 0.0
      $region32: #{modified_conv_alt_add.2} parent=27 // pred_fallthru
        _
      %v259 = vld [vmem:[%s1] sm:$0xff]
      %v260 = vld [vmem:[%s1 + $0x8] sm:$0xff]
      %v261 = vld [vmem:[%s233] sm:$0xf]
      %v262 = vld [vmem:[%s233 + $0x4] sm:$0xf]
      %v263 = vld [vmem:[%s233 + $0x8] sm:$0xf]
      %v264 = vld [vmem:[%s233 + $0xc] sm:$0xf]
      %v265 = vld [vmem:[%s233 + $0x10] sm:$0xf]
      %v266 = vld [vmem:[%s233 + $0x14] sm:$0xf]
      %v267 = vld [vmem:[%s233 + $0x18] sm:$0xf]
      %v268 = vld [vmem:[%s233 + $0x1c] sm:$0xf]
      %v269 = vld [vmem:[%s233 + $0x20] sm:$0xf]
      %v270 = vld [vmem:[%s233 + $0x24] sm:$0xf]
      %v271 = vld [vmem:[%s233 + $0x28] sm:$0xf]
      %v272 = vld [vmem:[%s233 + $0x2c] sm:$0xf]
      %v273 = vld [vmem:[%s233 + $0x30] sm:$0xf]
      %v274 = vld [vmem:[%s233 + $0x34] sm:$0xf]
      %v275 = vld [vmem:[%s233 + $0x38] sm:$0xf]
      %v276 = vld [vmem:[%s233 + $0x3c] sm:$0xf]
      %v277 = vld [vmem:[%s233 + $0x40] sm:$0xf]
      %v278 = vld [vmem:[%s233 + $0x44] sm:$0xf]
      %v279 = vld [vmem:[%s233 + $0x48] sm:$0xf]
      %v280 = vld [vmem:[%s233 + $0x4c] sm:$0xf]
      %v281 = vld [vmem:[%s233 + $0x50] sm:$0xf]
      %v282 = vld [vmem:[%s233 + $0x54] sm:$0xf]
      %v283 = vld [vmem:[%s233 + $0x58] sm:$0xf]
      %v284 = vld [vmem:[%s233 + $0x5c] sm:$0xf]
      %v285 = vld [vmem:[%s233 + $0x60] sm:$0xf]
      %v286 = vld [vmem:[%s233 + $0x64] sm:$0xf]
      %v289 = vunpack.c.l.b16 %v259
      %v290 = vunpack.c.h.b16 %v259
      %v291 = vunpack.c.l.b16 %v260
      %v292 = vunpack.c.h.b16 %v260
      %v293 = vpack.c.b16 %v291, %v289
      %v294 = vpack.c.b16 %v292, %v290
      %v322 = vunpack.c.l.b16 %v261
      %v323 = vunpack.c.l.b16 %v262
      %v324 = vunpack.c.l.b16 %v263
      %v325 = vunpack.c.l.b16 %v264
      %v326 = vunpack.c.l.b16 %v265
      %v327 = vunpack.c.l.b16 %v266
      %v328 = vunpack.c.l.b16 %v267
      %v329 = vunpack.c.l.b16 %v268
      %v330 = vunpack.c.l.b16 %v269
      %v331 = vunpack.c.l.b16 %v270
      %v332 = vunpack.c.l.b16 %v271
      %v333 = vunpack.c.l.b16 %v272
      %v334 = vunpack.c.l.b16 %v273
      %v335 = vunpack.c.l.b16 %v274
      %v336 = vunpack.c.l.b16 %v275
      %v337 = vunpack.c.l.b16 %v276
      %v338 = vunpack.c.l.b16 %v277
      %v339 = vunpack.c.l.b16 %v278
      %v340 = vunpack.c.l.b16 %v279
      %v341 = vunpack.c.l.b16 %v280
      %v342 = vunpack.c.l.b16 %v281
      %v343 = vunpack.c.l.b16 %v282
      %v344 = vunpack.c.l.b16 %v283
      %v345 = vunpack.c.l.b16 %v284
      %v346 = vunpack.c.l.b16 %v285
      %v347 = vunpack.c.l.b16 %v286
      %v348 = vpack.c.b16 %v323, %v322
      %v349 = vpack.c.b16 %v325, %v324
      %v350 = vpack.c.b16 %v327, %v326
      %v351 = vpack.c.b16 %v329, %v328
      %v352 = vpack.c.b16 %v331, %v330
      %v353 = vpack.c.b16 %v333, %v332
      %v354 = vpack.c.b16 %v335, %v334
      %v355 = vpack.c.b16 %v337, %v336
      %v356 = vpack.c.b16 %v339, %v338
      %v357 = vpack.c.b16 %v341, %v340
      %v358 = vpack.c.b16 %v343, %v342
      %v359 = vpack.c.b16 %v345, %v344
      %v360 = vpack.c.b16 %v347, %v346
      %vm374 = vcmask 654336
      %v376 = vsel %vm374, %v294, 0
      %378 = vmatprep.subr.bf16.mxu0 0
      %379 = vmatpush1.bf16.msra.mxu0 %v355
      %380 = vmatprep.subr.bf16.mxu0 0
      %381 = vmatpush1.bf16.msra.mxu0 %v354
      %382 = vmatprep.subr.bf16.mxu0 0
      %383 = vmatpush1.bf16.msra.mxu0 %v353
      %384 = vmatprep.subr.bf16.mxu0 0
      %385 = vmatpush1.bf16.msra.mxu0 %v352
      %386 = vmatprep.subr.bf16.mxu0 0
      %387 = vmatpush1.bf16.msra.mxu0 %v351
      %388 = vmatprep.subr.bf16.mxu0 0
      %389 = vmatpush1.bf16.msra.mxu0 %v350
      %390 = vmatprep.subr.bf16.mxu0 0
      %391 = vmatpush1.bf16.msra.mxu0 %v349
      %392 = vmatprep.subr.bf16.mxu0 0
      %393 = vmatpush1.bf16.msra.mxu0 %v348
      %394 = vmatprep.subr.bf16.mxu0 0
      %395 = vmatpush2.bf16.msra.mxu0 0
      %396 = vmatprep.subr.bf16.mxu0 0
      %397 = vmatpush2.bf16.msra.mxu0 0
      %398 = vmatprep.subr.bf16.mxu0 0
      %399 = vmatpush2.bf16.msra.mxu0 0
      %400 = vmatprep.subr.bf16.mxu0 0
      %401 = vmatpush2.bf16.msra.mxu0 %v360
      %402 = vmatprep.subr.bf16.mxu0 0
      %403 = vmatpush2.bf16.msra.mxu0 %v359
      %404 = vmatprep.subr.bf16.mxu0 0
      %405 = vmatpush2.bf16.msra.mxu0 %v358
      %406 = vmatprep.subr.bf16.mxu0 0
      %407 = vmatpush2.bf16.msra.mxu0 %v357
      %408 = vmatprep.subr.bf16.mxu0 0
      %409 = vmatpush2.bf16.msra.mxu0 %v356
      %410 = vmatprep.mubr.bf16.mxu0 %v376
      %411 = vmatmul.mubr.bf16.gmra.mxu0 %v293
      %v412 = vpop.f32.mrf.mxu0
      %v413 = vadd.f32 0.0, %v412
      %v414 = vpop.f32.mrf.mxu0
      %v415 = vpop.f32.mrf.mxu0
      %v416 = vadd.f32 0.0, %v415
      %v417 = vpop.f32.mrf.mxu0
      %418 = vdwg.mxu0
      %419 = vst [vmem:[%s249] sm:$0xff] %v413
      %420 = vst [vmem:[%s249 + $0x8] sm:$0xff] %v416
      %v421 = vld [vmem:[%s237] sm:$0xff]
      %v422 = vld [vmem:[%s237 + $0x8] sm:$0xff]
      %v423 = vadd.f32 %v421, %v413
      %v424 = vadd.f32 %v422, %v416
      %425 = vst [vmem:[%s237] sm:$0xff] %v423
      %426 = vst [vmem:[%s237 + $0x8] sm:$0xff] %v424
      %v427 = vld [vmem:[%s241] sm:$0xff]
      %v428 = vld [vmem:[%s241 + $0x8] sm:$0xff]
      %v429 = vmul.f32 %v413, %v413
      %v430 = vmul.f32 %v416, %v416
      %v431 = vadd.f32 %v427, %v429
      %v432 = vadd.f32 %v428, %v430
      %433 = vst [vmem:[%s241] sm:$0xff] %v431
      %434 = vst [vmem:[%s241 + $0x8] sm:$0xff] %v432
      %p435 = scmp.lt.s32.totalorder %s20, 0
      %s436 = scalar_select %p435, %s20, 0
      %s437 = smul.addr %s436, 8
      %s438 = scalar_lea.vmem %s2, %s437
      %p439 = scmp.lt.s32.totalorder %s20, 0
      %s440 = scalar_select %p439, %s20, 0
      %s441 = smul.addr %s440, 8
      %s442 = scalar_lea.vmem %s3, %s441
      %p443 = scmp.lt.s32.totalorder %s21, 1
      %s444 = scalar_select %p443, %s21, 1
      %p445 = scmp.lt.s32.totalorder %s20, 0
      %s446 = scalar_select %p445, %s20, 0
      %s447 = smul.addr %s444, 2
      %s448 = sadd.s32 %s446, %s447
      %s449 = smul.addr %s448, 8
      %s450 = scalar_lea.vmem %s4, %s449
      // Predicated region
      $region33: #{modified_conv_alt_add.2} parent=27 // pred_check
        %p451 = pneg %p95
      $region34: #{modified_conv_alt_add.2} parent=27 // pred_check_branch
        %453 = sbr.rel (%p451) target = $region36
      $region35: #{modified_conv_alt_add.2} parent=27 // pred_region
        _
      $region36: #{modified_conv_alt_add.2} parent=27 // pred_fallthru
        _
      // Predicated region
      $region37: #{modified_conv_alt_add.2} parent=27 // pred_check
        %p454 = pneg %p121
      $region38: #{modified_conv_alt_add.2} parent=27 // pred_check_branch
        %456 = sbr.rel (%p454) target = $region40
      $region39: #{modified_conv_alt_add.2} parent=27 // pred_region
        _
      $region40: #{modified_conv_alt_add.2} parent=27 // pred_fallthru
        _
      // Predicated region
      $region41: #{modified_conv_alt_add.2} parent=27 // pred_check
        %p457 = pneg %p149
      $region42: #{modified_conv_alt_add.2} parent=27 // pred_check_branch
        %459 = sbr.rel (%p457) target = $region44
      $region43: #{modified_conv_alt_add.2} parent=27 // pred_region
        _
      $region44: #{modified_conv_alt_add.2} parent=27 // pred_fallthru
        _
      // Predicated region
      $region45: #{modified_conv_alt_add.2} parent=27 // pred_check
        %p460 = pneg %p95
      $region46: #{modified_conv_alt_add.2} parent=27 // pred_check_branch
        %462 = sbr.rel (%p460) target = $region48
      $region47: #{modified_conv_alt_add.2} parent=27 // pred_region
        %p463 = scmp.lt.s32.totalorder %s20, 0
        %s464 = scalar_select %p463, %s20, 0
        %s465 = smul.addr %s464, 8
        %s466 = scalar_lea.vmem %s2, %s465
      $region48: #{modified_conv_alt_add.2} parent=27 // pred_fallthru
        _
      // Predicated region
      $region49: #{modified_conv_alt_add.2} parent=27 // pred_check
        %p467 = pneg %p121
      $region50: #{modified_conv_alt_add.2} parent=27 // pred_check_branch
        %469 = sbr.rel (%p467) target = $region52
      $region51: #{modified_conv_alt_add.2} parent=27 // pred_region
        %p470 = scmp.lt.s32.totalorder %s20, 0
        %s471 = scalar_select %p470, %s20, 0
        %s472 = smul.addr %s471, 8
        %s473 = scalar_lea.vmem %s3, %s472
      $region52: #{modified_conv_alt_add.2} parent=27 // pred_fallthru
        _
    $region28: #{modified_conv_alt_add.2} parent=5 // pred_fallthru
      _
    %p474 = scmp.le.s32.totalorder 2, %s11
    // Predicated region
    $region53: #{modified_conv_alt_add.2} parent=5 // pred_check
      %p475 = pneg %p474
    $region54: #{modified_conv_alt_add.2} parent=5 // pred_check_branch
      %477 = sbr.rel (%p475) target = $region56
    $region55: #{modified_conv_alt_add.2} parent=5 // pred_region
      %s478 = ssub.s32 %s11, 2
      // Predicated region
      $region57: #{modified_conv_alt_add.2} parent=55 // pred_check
        %p479 = pneg %p155
      $region58: #{modified_conv_alt_add.2} parent=55 // pred_check_branch
        %481 = sbr.rel (%p479) target = $region60
      $region59: #{modified_conv_alt_add.2} parent=55 // pred_region
        %p482 = scmp.lt.s32.totalorder %s23, 1
        %s483 = scalar_select %p482, %s23, 1
        %p484 = scmp.lt.s32.totalorder %s22, 0
        %s485 = scalar_select %p484, %s22, 0
        %s486 = smul.addr %s483, 2
        %s487 = sadd.s32 %s485, %s486
        %s488 = smul.addr %s487, 8
        %s489 = scalar_lea.vmem %s4, %s488
      $region60: #{modified_conv_alt_add.2} parent=55 // pred_fallthru
        _
    $region56: #{modified_conv_alt_add.2} parent=5 // pred_fallthru
      _
  $region6: #{modified_conv_alt_add.2} parent=0 // loop_footer
    %s15 = sadd.s32 1, %s11
  $region7: #{modified_conv_alt_add.2} parent=0 // loop_footer_branch
    %10 = sbr.rel target = $region3
  $region8: #{modified_conv_alt_add.2} parent=0 // loop_exit
    _

// kernel: modified_conv_alt_add.3
$region0: #{modified_conv_alt_add.3}
  #allocation0 [shape = 'u32[]', space=smem, size = 0x4, offset = 0x4, fixed_abs, tag = 'smem constant byte address 0x4 - core index']
  #allocation1 [shape = 'u32[144,128]{1,0:T(1,128)}', space=vmem, size = 0x12000, scoped, tag = 'internal scratch']
  %s0 = inlined_call_operand.vmem [shape: f32[2,16,128], index: 0, kind: input, shape index: {}]
  %s1 = inlined_call_operand.vmem [shape: f32[16,1], index: 1, kind: input, shape index: {}]
  %s2 = inlined_call_operand.vmem [shape: f32[16,1], index: 2, kind: input, shape index: {}]
  %s3 = inlined_call_operand.vmem [shape: f32[16,128], index: 3, kind: output, shape index: {}]
  %s4 = sld [smem:[#allocation0]]
  $region49: #{modified_conv_alt_add.3} parent=0
    _
  %s6 = ssub.s32 1, %s4
  %s7 = scalar_select 0, %s6, %s4
  loop: start=0, step=1, limit=4
  $region2: #{modified_conv_alt_add.3} parent=0 // loop_pre_header
    _
  $region3: #{modified_conv_alt_add.3} parent=0 // loop_header
    %s9 = sphi 0, %s13
    %p10 = scmp.ge.s32.totalorder %s9, 4
    %s16 = sphi 0, %s28
    %s17 = sphi 0, %s24
    %s18 = sphi 0, %s16
    %s19 = sphi 0, %s17
    %s20 = sphi 0, %s18
    %s21 = sphi 0, %s19
    %s33 = sphi 0, %s35
    %s36 = sphi 0, %s33
    %s37 = sphi 0, %s36
    %s53 = sphi 0, %s37
    %s57 = sphi 0, %s57
    %s59 = sphi 0, %s57
    %s60 = sphi 0, %s59
    %s74 = sphi 0, %s60
    %s78 = sphi 0, %s78
    %s80 = sphi 0, %s78
    %s81 = sphi 0, %s80
    %s95 = sphi 0, %s81
    %s101 = sphi 0, %s103
    %s104 = sphi 0, %s101
    %s105 = sphi 0, %s104
    %s121 = sphi 0, %s105
  $region4: #{modified_conv_alt_add.3} parent=0 // loop_header_branch
    %12 = sbr.rel (%p10) target = $region8
  $region5: #{modified_conv_alt_add.3} parent=0 // loop_body
    %s14 = ssub.s32 %s9, 1
    %s15 = ssub.s32 %s9, 2
    %s22 = sadd.s32 1, %s17
    %p23 = scmp.ge.s32.totalorder %s22, 2
    %s24 = scalar_select %p23, 0, %s22
    %s25 = sadd.s32 1, %s16
    %s26 = scalar_select %p23, %s25, %s16
    %p27 = scmp.ge.s32.totalorder %s26, 1
    %s28 = scalar_select %p27, 0, %s26
    %s29 = ssub.s32 %s17, %s24
    %s30 = ssub.s32 %s16, %s28
    %s31 = sor.u32 %s29, %s30
    %p32 = scmp.eq.s32.totalorder %s31, 0
    %s34 = sadd.s32 %s33, 1
    %s35 = scalar_select %p32, %s33, %s34
    %p38 = pneg %p32
    %p39 = scmp.eq.s32.totalorder %s9, 1
    %p40 = por %p38, %p39
    %p41 = scmp.ne.s32.totalorder %s33, %s36
    %p42 = scmp.eq.s32.totalorder %s9, 0
    %p43 = por %p41, %p42
    %p44 = scmp.ne.s32.totalorder %s33, %s36
    %p45 = scmp.eq.s32.totalorder %s14, 1
    %p46 = por %p44, %p45
    %p47 = scmp.ne.s32.totalorder %s36, %s37
    %p48 = scmp.eq.s32.totalorder %s14, 0
    %p49 = por %p47, %p48
    %p50 = scmp.ne.s32.totalorder %s36, %s37
    %p51 = scmp.eq.s32.totalorder %s15, 1
    %p52 = por %p50, %p51
    %p54 = scmp.ne.s32.totalorder %s37, %s53
    %p55 = scmp.eq.s32.totalorder %s15, 0
    %p56 = por %p54, %p55
    %s58 = sadd.s32 %s57, 1
    %p61 = scmp.eq.s32.totalorder %s9, 1
    %p62 = scmp.ne.s32.totalorder %s57, %s59
    %p63 = scmp.eq.s32.totalorder %s9, 0
    %p64 = por %p62, %p63
    %p65 = scmp.ne.s32.totalorder %s57, %s59
    %p66 = scmp.eq.s32.totalorder %s14, 1
    %p67 = por %p65, %p66
    %p68 = scmp.ne.s32.totalorder %s59, %s60
    %p69 = scmp.eq.s32.totalorder %s14, 0
    %p70 = por %p68, %p69
    %p71 = scmp.ne.s32.totalorder %s59, %s60
    %p72 = scmp.eq.s32.totalorder %s15, 1
    %p73 = por %p71, %p72
    %p75 = scmp.ne.s32.totalorder %s60, %s74
    %p76 = scmp.eq.s32.totalorder %s15, 0
    %p77 = por %p75, %p76
    %s79 = sadd.s32 %s78, 1
    %p82 = scmp.eq.s32.totalorder %s9, 1
    %p83 = scmp.ne.s32.totalorder %s78, %s80
    %p84 = scmp.eq.s32.totalorder %s9, 0
    %p85 = por %p83, %p84
    %p86 = scmp.ne.s32.totalorder %s78, %s80
    %p87 = scmp.eq.s32.totalorder %s14, 1
    %p88 = por %p86, %p87
    %p89 = scmp.ne.s32.totalorder %s80, %s81
    %p90 = scmp.eq.s32.totalorder %s14, 0
    %p91 = por %p89, %p90
    %p92 = scmp.ne.s32.totalorder %s80, %s81
    %p93 = scmp.eq.s32.totalorder %s15, 1
    %p94 = por %p92, %p93
    %p96 = scmp.ne.s32.totalorder %s81, %s95
    %p97 = scmp.eq.s32.totalorder %s15, 0
    %p98 = por %p96, %p97
    %s99 = ssub.s32 %s16, %s28
    %p100 = scmp.eq.s32.totalorder %s99, 0
    %s102 = sadd.s32 %s101, 1
    %s103 = scalar_select %p100, %s101, %s102
    %p106 = pneg %p100
    %p107 = scmp.eq.s32.totalorder %s9, 1
    %p108 = por %p106, %p107
    %p109 = scmp.ne.s32.totalorder %s101, %s104
    %p110 = scmp.eq.s32.totalorder %s9, 0
    %p111 = por %p109, %p110
    %p112 = scmp.ne.s32.totalorder %s101, %s104
    %p113 = scmp.eq.s32.totalorder %s14, 1
    %p114 = por %p112, %p113
    %p115 = scmp.ne.s32.totalorder %s104, %s105
    %p116 = scmp.eq.s32.totalorder %s14, 0
    %p117 = por %p115, %p116
    %p118 = scmp.ne.s32.totalorder %s104, %s105
    %p119 = scmp.eq.s32.totalorder %s15, 1
    %p120 = por %p118, %p119
    %p122 = scmp.ne.s32.totalorder %s105, %s121
    %p123 = scmp.eq.s32.totalorder %s15, 0
    %p124 = por %p122, %p123
    %p125 = scmp.le.s32.totalorder 1, %s9
    %p126 = scmp.lt.s32.totalorder %s9, 3
    %p127 = pnand %p125, %p126
    %p128 = pneg %p127
    // Predicated region
    $region9: #{modified_conv_alt_add.3} parent=5 // pred_check
      _
    $region10: #{modified_conv_alt_add.3} parent=5 // pred_check_branch
      %130 = sbr.rel (%p127) target = $region12
    $region11: #{modified_conv_alt_add.3} parent=5 // pred_region
      %s131 = ssub.s32 %s9, 1
      // Predicated region
      $region13: #{modified_conv_alt_add.3} parent=11 // pred_check
        %p132 = pneg %p70
      $region14: #{modified_conv_alt_add.3} parent=11 // pred_check_branch
        %134 = sbr.rel (%p132) target = $region16
      $region15: #{modified_conv_alt_add.3} parent=11 // pred_region
        _
      $region16: #{modified_conv_alt_add.3} parent=11 // pred_fallthru
        _
      // Predicated region
      $region17: #{modified_conv_alt_add.3} parent=11 // pred_check
        %p135 = pneg %p91
      $region18: #{modified_conv_alt_add.3} parent=11 // pred_check_branch
        %137 = sbr.rel (%p135) target = $region20
      $region19: #{modified_conv_alt_add.3} parent=11 // pred_region
        _
      $region20: #{modified_conv_alt_add.3} parent=11 // pred_fallthru
        _
    $region12: #{modified_conv_alt_add.3} parent=5 // pred_fallthru
      _
    %p138 = scmp.lt.s32.totalorder %s9, 2
    // Predicated region
    $region21: #{modified_conv_alt_add.3} parent=5 // pred_check
      %p139 = pneg %p138
    $region22: #{modified_conv_alt_add.3} parent=5 // pred_check_branch
      %141 = sbr.rel (%p139) target = $region24
    $region23: #{modified_conv_alt_add.3} parent=5 // pred_region
      // Predicated region
      $region25: #{modified_conv_alt_add.3} parent=23 // pred_check
        %p142 = pneg %p43
      $region26: #{modified_conv_alt_add.3} parent=23 // pred_check_branch
        %144 = sbr.rel (%p142) target = $region28
      $region27: #{modified_conv_alt_add.3} parent=23 // pred_region
        %p145 = scmp.lt.s32.totalorder %s17, 1
        %s146 = scalar_select %p145, %s17, 1
        %p147 = scmp.lt.s32.totalorder %s16, 0
        %s148 = scalar_select %p147, %s16, 0
        %s149 = smul.addr %s146, 2
        %s150 = sadd.s32 %s148, %s149
        %s151 = smul.addr %s150, 8
        %s152 = scalar_lea.vmem %s0, %s151
      $region28: #{modified_conv_alt_add.3} parent=23 // pred_fallthru
        _
    $region24: #{modified_conv_alt_add.3} parent=5 // pred_fallthru
      _
    %p153 = scmp.le.s32.totalorder 1, %s9
    %p154 = scmp.lt.s32.totalorder %s9, 3
    %p155 = pnand %p153, %p154
    %p156 = pneg %p155
    // Predicated region
    $region29: #{modified_conv_alt_add.3} parent=5 // pred_check
      _
    $region30: #{modified_conv_alt_add.3} parent=5 // pred_check_branch
      %158 = sbr.rel (%p155) target = $region32
    $region31: #{modified_conv_alt_add.3} parent=5 // pred_region
      %s159 = ssub.s32 %s9, 1
      %p160 = scmp.lt.s32.totalorder %s19, 1
      %s161 = scalar_select %p160, %s19, 1
      %p162 = scmp.lt.s32.totalorder %s18, 0
      %s163 = scalar_select %p162, %s18, 0
      %s164 = smul.addr %s161, 2
      %s165 = sadd.s32 %s163, %s164
      %s166 = smul.addr %s165, 8
      %s167 = scalar_lea.vmem %s0, %s166
      %p168 = pneg %p49
      %p169 = pneg %p46
      %p170 = pneg %p70
      %p171 = pneg %p67
      %p172 = pneg %p91
      %p173 = pneg %p88
      %p174 = pneg %p117
      %p175 = pneg %p114
      %p176 = scmp.lt.s32.totalorder %s18, 0
      %s177 = scalar_select %p176, %s18, 0
      %s178 = smul.addr %s177, 8
      %s179 = scalar_lea.vmem %s3, %s178
      %p180 = scmp.lt.s32.totalorder %s19, 1
      %s181 = scalar_select %p180, %s19, 1
      %p182 = scmp.lt.s32.totalorder %s18, 0
      %s183 = scalar_select %p182, %s18, 0
      %s184 = smul.addr %s181, 2
      %s185 = sadd.s32 %s183, %s184
      %s186 = smul.addr %s185, 8
      %s187 = scalar_lea.vmem %s0, %s186
      %p188 = scmp.lt.s32.totalorder %s18, 0
      %s189 = scalar_select %p188, %s18, 0
      %s190 = smul.addr %s189, 8
      %s191 = scalar_lea.vmem %s3, %s190
      %p192 = scmp.eq.s32.totalorder %s19, 0
      // Predicated region
      $region33: #{modified_conv_alt_add.3} parent=31 // pred_check
        %p193 = pneg %p192
      $region34: #{modified_conv_alt_add.3} parent=31 // pred_check_branch
        %195 = sbr.rel (%p193) target = $region36
      $region35: #{modified_conv_alt_add.3} parent=31 // pred_region
        %196 = vst [vmem:[%s191] sm:$0xff] 0.0
        %197 = vst [vmem:[%s191 + $0x8] sm:$0xff] 0.0
      $region36: #{modified_conv_alt_add.3} parent=31 // pred_fallthru
        _
      %v198 = vld [vmem:[%s191] sm:$0xff]
      %v199 = vld [vmem:[%s191 + $0x8] sm:$0xff]
      %v200 = vld [vmem:[%s187] sm:$0xff]
      %v201 = vld [vmem:[%s187 + $0x8] sm:$0xff]
      %v202 = vld [vmem:[%s1] sm:$0xff]
      %v203 = vld [vmem:[%s1 + $0x8] sm:$0xff]
      %205 = vset.pattern.permute.xlu0 0
      %206 = vperm.xlu0 %205, %v202
      %v207 = vpop.permute.xlu0 %206
      %210 = vset.pattern.permute.xlu0 0
      %211 = vperm.xlu0 %210, %v203
      %v212 = vpop.permute.xlu0 %211
      %v214 = vmul.f32 %v200, %v207
      %v215 = vmul.f32 %v201, %v212
      %v216 = vld [vmem:[%s2] sm:$0xff]
      %v217 = vld [vmem:[%s2 + $0x8] sm:$0xff]
      %219 = vset.pattern.permute.xlu0 0
      %220 = vperm.xlu0 %219, %v216
      %v221 = vpop.permute.xlu0 %220
      %224 = vset.pattern.permute.xlu0 0
      %225 = vperm.xlu0 %224, %v217
      %v226 = vpop.permute.xlu0 %225
      %v228 = vadd.f32 %v214, %v221
      %v229 = vadd.f32 %v215, %v226
      %v230 = vmax.f32 %v228, 0.0
      %v231 = vmax.f32 %v229, 0.0
      %v232 = vadd.f32 %v198, %v230
      %v233 = vadd.f32 %v199, %v231
      %234 = vst [vmem:[%s191] sm:$0xff] %v232
      %235 = vst [vmem:[%s191 + $0x8] sm:$0xff] %v233
      %p236 = scmp.lt.s32.totalorder %s18, 0
      %s237 = scalar_select %p236, %s18, 0
      %s238 = smul.addr %s237, 8
      %s239 = scalar_lea.vmem %s3, %s238
      // Predicated region
      $region37: #{modified_conv_alt_add.3} parent=31 // pred_check
        %p240 = pneg %p114
      $region38: #{modified_conv_alt_add.3} parent=31 // pred_check_branch
        %242 = sbr.rel (%p240) target = $region40
      $region39: #{modified_conv_alt_add.3} parent=31 // pred_region
        _
      $region40: #{modified_conv_alt_add.3} parent=31 // pred_fallthru
        _
      // Predicated region
      $region41: #{modified_conv_alt_add.3} parent=31 // pred_check
        %p243 = pneg %p114
      $region42: #{modified_conv_alt_add.3} parent=31 // pred_check_branch
        %245 = sbr.rel (%p243) target = $region44
      $region43: #{modified_conv_alt_add.3} parent=31 // pred_region
        %p246 = scmp.lt.s32.totalorder %s18, 0
        %s247 = scalar_select %p246, %s18, 0
        %s248 = smul.addr %s247, 8
        %s249 = scalar_lea.vmem %s3, %s248
      $region44: #{modified_conv_alt_add.3} parent=31 // pred_fallthru
        _
    $region32: #{modified_conv_alt_add.3} parent=5 // pred_fallthru
      _
    %p250 = scmp.le.s32.totalorder 2, %s9
    // Predicated region
    $region45: #{modified_conv_alt_add.3} parent=5 // pred_check
      %p251 = pneg %p250
    $region46: #{modified_conv_alt_add.3} parent=5 // pred_check_branch
      %253 = sbr.rel (%p251) target = $region48
    $region47: #{modified_conv_alt_add.3} parent=5 // pred_region
      %s254 = ssub.s32 %s9, 2
    $region48: #{modified_conv_alt_add.3} parent=5 // pred_fallthru
      _
  $region6: #{modified_conv_alt_add.3} parent=0 // loop_footer
    %s13 = sadd.s32 1, %s9
  $region7: #{modified_conv_alt_add.3} parent=0 // loop_footer_branch
    %8 = sbr.rel target = $region3
  $region8: #{modified_conv_alt_add.3} parent=0 // loop_exit
    _

</llo_original>
